<compile_context>
chip_gen: v7x
topology: tpu7x:2x2x1
jax: 0.10.0
libtpu: 0.0.40
codegen_flags: <defaults>
</compile_context>

<pallas_src>
import functools

import jax
import jax.numpy as jnp
from jax.experimental import pallas as pl
from jax.experimental.pallas import tpu as pltpu


def _soft_cca_kernel(m1_ref, m2_ref, x_ref, y_ref, out_ref,
                     acc11_ref, acc22_ref, diag1_ref, diag2_ref, corr_ref,
                     *, p, r, alpha, eps, n_rows):
    pid = pl.program_id(0)
    nsteps = pl.num_programs(0)
    block_rows, d = x_ref.shape  # static block shape

    @pl.when(pid == 0)
    def _init():
        acc11_ref[...] = jnp.zeros_like(acc11_ref)
        acc22_ref[...] = jnp.zeros_like(acc22_ref)
        diag1_ref[...] = jnp.zeros_like(diag1_ref)
        diag2_ref[...] = jnp.zeros_like(diag2_ref)
        corr_ref[...] = jnp.zeros_like(corr_ref)

    # Center this tile (column means precomputed in the wrapper, f32, resident).
    xc = x_ref[...].astype(jnp.float32) - m1_ref[...]
    yc = y_ref[...].astype(jnp.float32) - m2_ref[...]

    # Mask out padded rows of the last (partial) tile, if any (static check, so
    # full tiles compile with zero masking work).
    if n_rows % block_rows != 0:
        row = jax.lax.broadcasted_iota(jnp.int32, (block_rows, 1), 0)
        valid = (pid * block_rows + row) < n_rows
        xc = jnp.where(valid, xc, 0.0)
        yc = jnp.where(valid, yc, 0.0)

    # Gram accumulation on the MXU: contract over the batch axis -> (d, d).
    dims = (((0,), (0,)), ((), ()))
    acc11_ref[...] += jax.lax.dot_general(xc, xc, dims,
                                          preferred_element_type=jnp.float32)
    acc22_ref[...] += jax.lax.dot_general(yc, yc, dims,
                                          preferred_element_type=jnp.float32)

    # diag(Gram) == column-wise sum of squares; accumulate separately so the
    # finalize step never needs an identity-matrix mask (XLU sublane reduce,
    # overlaps with the MXU work above).
    diag1_ref[...] += jnp.sum(xc * xc, axis=0, keepdims=True)
    diag2_ref[...] += jnp.sum(yc * yc, axis=0, keepdims=True)

    # Correlation term: running sum of per-row p-norms of (Xc - Yc).
    diff = xc - yc
    if p == 2:
        row_norm = jnp.sqrt(jnp.sum(diff * diff, axis=1, keepdims=True))
    else:
        row_norm = jnp.sum(jnp.abs(diff) ** p, axis=1, keepdims=True) ** (1.0 / p)
    corr_ref[...] += jnp.sum(row_norm, axis=0, keepdims=True)

    @pl.when(pid == nsteps - 1)
    def _finalize():
        inv_nm1 = jnp.float32(1.0 / (n_rows - 1))

        def decorr_l1(gram_ref, diag_ref):
            gram = gram_ref[...]   # accumulated Xc^T Xc, (d, d)
            dg = diag_ref[...]     # == diag(gram), (1, d), non-negative
            # S = gram/(N-1) + r*I ; off-diagonal L1 = (sum|gram| - sum diag)/(N-1)
            off_l1 = (jnp.sum(jnp.abs(gram)) - jnp.sum(dg)) * inv_nm1
            var = dg * inv_nm1 + jnp.float32(r)
            new_diag = 1.0 / (var + jnp.float32(eps)) - var
            return off_l1 + jnp.sum(jnp.abs(new_diag))

        l1 = decorr_l1(acc11_ref, diag1_ref) + decorr_l1(acc22_ref, diag2_ref)
        decorr_term = jnp.float32(0.5 * alpha / (d * d)) * l1
        corr_term = jnp.float32(0.5 / n_rows) * corr_ref[...]      # (1, 1)
        out_ref[...] = corr_term + decorr_term


def soft_cca_loss(X, Y, *, p=2, r=1e-7, alpha=500.0, eps=1e-7, block_rows=None):
    """Pallas TPU implementation of SoftCCALoss.forward. Returns a scalar f32."""
    assert X.shape == Y.shape and X.ndim == 2
    N, d = X.shape
    assert N >= 2, "SoftCCALoss needs at least 2 samples (divides by N-1)."

    # Column means: one XLA reduce in f32 (no materialized f32 copy of X/Y),
    # fed to the kernel as resident (1, d) blocks so the kernel itself only
    # needs a single pass over X/Y.
    m1 = jnp.mean(X, axis=0, keepdims=True, dtype=jnp.float32)
    m2 = jnp.mean(Y, axis=0, keepdims=True, dtype=jnp.float32)

    # Batch-tile size: large enough to amortize per-grid-step overhead and the
    # per-step XLU transpose of the LHS; sublane (8) aligned when tiling, and
    # scaled down for wide feature dims so double-buffered tiles stay well
    # inside the 64 MiB v7x VMEM budget.
    if block_rows is None:
        itemsize = jnp.dtype(X.dtype).itemsize
        tile_budget = 4 * 1024 * 1024                       # per X/Y tile
        block_rows = max(8, min(512, tile_budget // max(1, d * itemsize)))
    block_rows = min(block_rows, N)
    if block_rows != N:
        block_rows = max(8, (block_rows // 8) * 8)
    grid_n = pl.cdiv(N, block_rows)

    # Explicit VMEM budget: double-buffered X/Y tiles + (d, d) accumulators.
    # Capped at 64 MiB so the same tiling is valid on v7x.
    itemsize = jnp.dtype(X.dtype).itemsize
    needed = (2 * 2 * block_rows * d * itemsize    # x/y tiles, double buffered
              + 2 * d * d * 4                      # Gram accumulators
              + 6 * d * 4 + 4096)                  # diag/corr scratch + means
    vmem_limit = int(min(max(2 * needed, 32 * 1024 * 1024), 64 * 1024 * 1024))

    kernel = functools.partial(
        _soft_cca_kernel,
        p=p, r=float(r), alpha=float(alpha), eps=float(eps), n_rows=N)

    out = pl.pallas_call(
        kernel,
        out_shape=jax.ShapeDtypeStruct((1, 1), jnp.float32),
        grid_spec=pltpu.PrefetchScalarGridSpec(
            num_scalar_prefetch=0,
            grid=(grid_n,),
            in_specs=[
                pl.BlockSpec((1, d), lambda i: (0, 0)),             # m1 (resident)
                pl.BlockSpec((1, d), lambda i: (0, 0)),             # m2 (resident)
                pl.BlockSpec((block_rows, d), lambda i: (i, 0)),    # X tile
                pl.BlockSpec((block_rows, d), lambda i: (i, 0)),    # Y tile
            ],
            out_specs=pl.BlockSpec((1, 1), lambda i: (0, 0)),
            scratch_shapes=[
                pltpu.VMEM((d, d), jnp.float32),   # Gram(Xc)
                pltpu.VMEM((d, d), jnp.float32),   # Gram(Yc)
                pltpu.VMEM((1, d), jnp.float32),   # diag accumulator (X)
                pltpu.VMEM((1, d), jnp.float32),   # diag accumulator (Y)
                pltpu.VMEM((1, 1), jnp.float32),   # sum of per-row norms
            ],
        ),
        compiler_params=pltpu.CompilerParams(
            dimension_semantics=("arbitrary",),
            vmem_limit_bytes=vmem_limit,
        ),
    )(m1, m2, X, Y)
    return out.reshape(())


def soft_cca_loss_ref(X, Y, *, p=2, r=1e-7, alpha=500.0, eps=1e-7):
    """Pure-JAX reference matching the PyTorch forward exactly."""
    X = X.astype(jnp.float32)
    Y = Y.astype(jnp.float32)
    N, d = X.shape
    Xc = X - jnp.mean(X, axis=0, keepdims=True)
    Yc = Y - jnp.mean(Y, axis=0, keepdims=True)
    eye = jnp.eye(d, dtype=jnp.float32)
    S11 = Xc.T @ Xc / (N - 1) + r * eye
    S22 = Yc.T @ Yc / (N - 1) + r * eye
    corr = 0.5 * jnp.mean(jnp.linalg.norm(Xc - Yc, ord=p, axis=1))
    v1 = jnp.diag(S11)
    v2 = jnp.diag(S22)
    S11m = S11 - jnp.diag(jnp.diag(S11)) + jnp.diag(1.0 / (v1 + eps) - v1)
    S22m = S22 - jnp.diag(jnp.diag(S22)) + jnp.diag(1.0 / (v2 + eps) - v2)
    decorr = 0.5 * (jnp.sum(jnp.abs(S11m)) + jnp.sum(jnp.abs(S22m))) * (1.0 / d**2) * alpha
    return corr + decorr


if __name__ == "__main__":
    key = jax.random.PRNGKey(0)
    kx, ky, kx2, ky2 = jax.random.split(key, 4)

    # Small shapes consistent with the module: (batch, features).
    N, d = 16, 32
    X = jax.random.normal(kx, (N, d), dtype=jnp.float32)
    Y = jax.random.normal(ky, (N, d), dtype=jnp.float32)

    loss = jax.block_until_ready(soft_cca_loss(X, Y))
    ref = jax.block_until_ready(soft_cca_loss_ref(X, Y))
    assert jnp.allclose(loss, ref, rtol=1e-4, atol=1e-4), (loss, ref)

    # Also exercise the batch-tiled path with a partial last tile (masking).
    N2, d2 = 20, 32
    X2 = jax.random.normal(kx2, (N2, d2), dtype=jnp.float32)
    Y2 = jax.random.normal(ky2, (N2, d2), dtype=jnp.float32)
    loss2 = jax.block_until_ready(soft_cca_loss(X2, Y2, block_rows=8))
    ref2 = jax.block_until_ready(soft_cca_loss_ref(X2, Y2))
    assert jnp.allclose(loss2, ref2, rtol=1e-4, atol=1e-4), (loss2, ref2)

    print("KERNEL_OK")
</pallas_src>

<mosaic_0001>
module attributes {stable_mosaic.version = 11 : i64} {
  func.func @_soft_cca_kernel(%arg0: i32, %arg1: memref<1x32xf32, #tpu.memory_space<vmem>>, %arg2: memref<1x32xf32, #tpu.memory_space<vmem>>, %arg3: memref<16x32xf32, #tpu.memory_space<vmem>>, %arg4: memref<16x32xf32, #tpu.memory_space<vmem>>, %arg5: memref<1x1xf32, #tpu.memory_space<vmem>>, %arg6: memref<32x32xf32, #tpu.memory_space<vmem>>, %arg7: memref<32x32xf32, #tpu.memory_space<vmem>>, %arg8: memref<1x32xf32, #tpu.memory_space<vmem>>, %arg9: memref<1x32xf32, #tpu.memory_space<vmem>>, %arg10: memref<1x1xf32, #tpu.memory_space<vmem>>) attributes {dimension_semantics = [#tpu.dimension_semantics<arbitrary>], iteration_bounds = array<i64: 1>, scalar_prefetch = 0 : i64, scratch_operands = 5 : i64, tpu.core_type = #tpu.core_type<tc>, window_params = [{pipeline_mode = #tpu.pipeline_mode<synchronous>, transform_indices = @transform_0, window_bounds = array<i64: 1, 32>}, {pipeline_mode = #tpu.pipeline_mode<synchronous>, transform_indices = @transform_1, window_bounds = array<i64: 1, 32>}, {transform_indices = @transform_2, window_bounds = array<i64: 16, 32>}, {transform_indices = @transform_3, window_bounds = array<i64: 16, 32>}, {pipeline_mode = #tpu.pipeline_mode<synchronous>, transform_indices = @transform_4, window_bounds = array<i64: 1, 1>}]} {
    %c0_i32 = arith.constant 0 : i32
    %0 = arith.cmpi eq, %arg0, %c0_i32 : i32
    %1 = arith.extui %0 : i1 to i32
    %c0_i32_0 = arith.constant 0 : i32
    %2 = arith.cmpi ne, %1, %c0_i32_0 : i32
    scf.if %2 {
      %cst_35 = arith.constant 0.000000e+00 : f32
      %44 = vector.broadcast %cst_35 : f32 to vector<32x32xf32>
      %c0_36 = arith.constant 0 : index
      %c0_37 = arith.constant 0 : index
      %45 = vector.load %arg6[%c0_36, %c0_37] : memref<32x32xf32, #tpu.memory_space<vmem>>, vector<32x32xf32>
      tpu.vector_store %arg6[%c0_36, %c0_37], %44 {strides = array<i32>} : memref<32x32xf32, #tpu.memory_space<vmem>>, vector<32x32xf32>,
      %cst_38 = arith.constant 0.000000e+00 : f32
      %46 = vector.broadcast %cst_38 : f32 to vector<32x32xf32>
      %c0_39 = arith.constant 0 : index
      %c0_40 = arith.constant 0 : index
      %47 = vector.load %arg7[%c0_39, %c0_40] : memref<32x32xf32, #tpu.memory_space<vmem>>, vector<32x32xf32>
      tpu.vector_store %arg7[%c0_39, %c0_40], %46 {strides = array<i32>} : memref<32x32xf32, #tpu.memory_space<vmem>>, vector<32x32xf32>,
      %cst_41 = arith.constant 0.000000e+00 : f32
      %48 = vector.broadcast %cst_41 : f32 to vector<1x32xf32>
      %c0_42 = arith.constant 0 : index
      %c0_43 = arith.constant 0 : index
      %49 = vector.load %arg8[%c0_42, %c0_43] : memref<1x32xf32, #tpu.memory_space<vmem>>, vector<1x32xf32>
      tpu.vector_store %arg8[%c0_42, %c0_43], %48 {strides = array<i32>} : memref<1x32xf32, #tpu.memory_space<vmem>>, vector<1x32xf32>,
      %cst_44 = arith.constant 0.000000e+00 : f32
      %50 = vector.broadcast %cst_44 : f32 to vector<1x32xf32>
      %c0_45 = arith.constant 0 : index
      %c0_46 = arith.constant 0 : index
      %51 = vector.load %arg9[%c0_45, %c0_46] : memref<1x32xf32, #tpu.memory_space<vmem>>, vector<1x32xf32>
      tpu.vector_store %arg9[%c0_45, %c0_46], %50 {strides = array<i32>} : memref<1x32xf32, #tpu.memory_space<vmem>>, vector<1x32xf32>,
      %cst_47 = arith.constant 0.000000e+00 : f32
      %52 = vector.broadcast %cst_47 : f32 to vector<1x1xf32>
      %c0_48 = arith.constant 0 : index
      %c0_49 = arith.constant 0 : index
      %53 = vector.load %arg10[%c0_48, %c0_49] : memref<1x1xf32, #tpu.memory_space<vmem>>, vector<1x1xf32>
      tpu.vector_store %arg10[%c0_48, %c0_49], %52 {strides = array<i32>} : memref<1x1xf32, #tpu.memory_space<vmem>>, vector<1x1xf32>,
    } else {
    }
    %c0 = arith.constant 0 : index
    %c0_1 = arith.constant 0 : index
    %3 = vector.load %arg3[%c0, %c0_1] : memref<16x32xf32, #tpu.memory_space<vmem>>, vector<16x32xf32>
    %c0_2 = arith.constant 0 : index
    %c0_3 = arith.constant 0 : index
    %4 = vector.load %arg1[%c0_2, %c0_3] : memref<1x32xf32, #tpu.memory_space<vmem>>, vector<1x32xf32>
    %5 = vector.broadcast %4 : vector<1x32xf32> to vector<16x32xf32>
    %6 = arith.subf %3, %5 : vector<16x32xf32>
    %c0_4 = arith.constant 0 : index
    %c0_5 = arith.constant 0 : index
    %7 = vector.load %arg4[%c0_4, %c0_5] : memref<16x32xf32, #tpu.memory_space<vmem>>, vector<16x32xf32>
    %c0_6 = arith.constant 0 : index
    %c0_7 = arith.constant 0 : index
    %8 = vector.load %arg2[%c0_6, %c0_7] : memref<1x32xf32, #tpu.memory_space<vmem>>, vector<1x32xf32>
    %9 = vector.broadcast %8 : vector<1x32xf32> to vector<16x32xf32>
    %10 = arith.subf %7, %9 : vector<16x32xf32>
    %c0_8 = arith.constant 0 : index
    %c0_9 = arith.constant 0 : index
    %11 = vector.load %arg6[%c0_8, %c0_9] : memref<32x32xf32, #tpu.memory_space<vmem>>, vector<32x32xf32>
    %cst = arith.constant dense<0.000000e+00> : vector<32x32xf32>
    %12 = tpu.matmul %6, %6, %cst {dimension_numbers = #tpu.dot_dimension_numbers<[0], [0], [1], [1], [0, 1, 1, 1], [], []>} : vector<16x32xf32>, vector<16x32xf32>, vector<32x32xf32> -> vector<32x32xf32>
    %13 = arith.addf %11, %12 : vector<32x32xf32>
    %c0_10 = arith.constant 0 : index
    %c0_11 = arith.constant 0 : index
    %14 = vector.load %arg6[%c0_10, %c0_11] : memref<32x32xf32, #tpu.memory_space<vmem>>, vector<32x32xf32>
    tpu.vector_store %arg6[%c0_10, %c0_11], %13 {strides = array<i32>} : memref<32x32xf32, #tpu.memory_space<vmem>>, vector<32x32xf32>,
    %c0_12 = arith.constant 0 : index
    %c0_13 = arith.constant 0 : index
    %15 = vector.load %arg7[%c0_12, %c0_13] : memref<32x32xf32, #tpu.memory_space<vmem>>, vector<32x32xf32>
    %cst_14 = arith.constant dense<0.000000e+00> : vector<32x32xf32>
    %16 = tpu.matmul %10, %10, %cst_14 {dimension_numbers = #tpu.dot_dimension_numbers<[0], [0], [1], [1], [0, 1, 1, 1], [], []>} : vector<16x32xf32>, vector<16x32xf32>, vector<32x32xf32> -> vector<32x32xf32>
    %17 = arith.addf %15, %16 : vector<32x32xf32>
    %c0_15 = arith.constant 0 : index
    %c0_16 = arith.constant 0 : index
    %18 = vector.load %arg7[%c0_15, %c0_16] : memref<32x32xf32, #tpu.memory_space<vmem>>, vector<32x32xf32>
    tpu.vector_store %arg7[%c0_15, %c0_16], %17 {strides = array<i32>} : memref<32x32xf32, #tpu.memory_space<vmem>>, vector<32x32xf32>,
    %c0_17 = arith.constant 0 : index
    %c0_18 = arith.constant 0 : index
    %19 = vector.load %arg8[%c0_17, %c0_18] : memref<1x32xf32, #tpu.memory_space<vmem>>, vector<1x32xf32>
    %20 = arith.mulf %6, %6 : vector<16x32xf32>
    %cst_19 = arith.constant dense<0.000000e+00> : vector<32xf32>
    %21 = vector.multi_reduction <add>, %20, %cst_19 [0] : vector<16x32xf32> to vector<32xf32>
    %22 = vector.shape_cast %21 : vector<32xf32> to vector<1x32xf32>
    %23 = arith.addf %19, %22 : vector<1x32xf32>
    %c0_20 = arith.constant 0 : index
    %c0_21 = arith.constant 0 : index
    %24 = vector.load %arg8[%c0_20, %c0_21] : memref<1x32xf32, #tpu.memory_space<vmem>>, vector<1x32xf32>
    tpu.vector_store %arg8[%c0_20, %c0_21], %23 {strides = array<i32>} : memref<1x32xf32, #tpu.memory_space<vmem>>, vector<1x32xf32>,
    %c0_22 = arith.constant 0 : index
    %c0_23 = arith.constant 0 : index
    %25 = vector.load %arg9[%c0_22, %c0_23] : memref<1x32xf32, #tpu.memory_space<vmem>>, vector<1x32xf32>
    %26 = arith.mulf %10, %10 : vector<16x32xf32>
    %cst_24 = arith.constant dense<0.000000e+00> : vector<32xf32>
    %27 = vector.multi_reduction <add>, %26, %cst_24 [0] : vector<16x32xf32> to vector<32xf32>
    %28 = vector.shape_cast %27 : vector<32xf32> to vector<1x32xf32>
    %29 = arith.addf %25, %28 : vector<1x32xf32>
    %c0_25 = arith.constant 0 : index
    %c0_26 = arith.constant 0 : index
    %30 = vector.load %arg9[%c0_25, %c0_26] : memref<1x32xf32, #tpu.memory_space<vmem>>, vector<1x32xf32>
    tpu.vector_store %arg9[%c0_25, %c0_26], %29 {strides = array<i32>} : memref<1x32xf32, #tpu.memory_space<vmem>>, vector<1x32xf32>,
    %31 = arith.subf %6, %10 : vector<16x32xf32>
    %32 = arith.mulf %31, %31 : vector<16x32xf32>
    %cst_27 = arith.constant dense<0.000000e+00> : vector<16xf32>
    %33 = vector.multi_reduction <add>, %32, %cst_27 [1] : vector<16x32xf32> to vector<16xf32>
    %34 = vector.shape_cast %33 : vector<16xf32> to vector<16x1xf32>
    %35 = math.sqrt %34 : vector<16x1xf32>
    %c0_28 = arith.constant 0 : index
    %c0_29 = arith.constant 0 : index
    %36 = vector.load %arg10[%c0_28, %c0_29] : memref<1x1xf32, #tpu.memory_space<vmem>>, vector<1x1xf32>
    %cst_30 = arith.constant dense<0.000000e+00> : vector<1xf32>
    %37 = vector.multi_reduction <add>, %35, %cst_30 [0] : vector<16x1xf32> to vector<1xf32>
    %38 = vector.shape_cast %37 : vector<1xf32> to vector<1x1xf32>
    %39 = arith.addf %36, %38 : vector<1x1xf32>
    %c0_31 = arith.constant 0 : index
    %c0_32 = arith.constant 0 : index
    %40 = vector.load %arg10[%c0_31, %c0_32] : memref<1x1xf32, #tpu.memory_space<vmem>>, vector<1x1xf32>
    tpu.vector_store %arg10[%c0_31, %c0_32], %39 {strides = array<i32>} : memref<1x1xf32, #tpu.memory_space<vmem>>, vector<1x1xf32>,
    %c0_i32_33 = arith.constant 0 : i32
    %41 = arith.cmpi eq, %arg0, %c0_i32_33 : i32
    %42 = arith.extui %41 : i1 to i32
    %c0_i32_34 = arith.constant 0 : i32
    %43 = arith.cmpi ne, %42, %c0_i32_34 : i32
    scf.if %43 {
      %c0_35 = arith.constant 0 : index
      %c0_36 = arith.constant 0 : index
      %44 = vector.load %arg6[%c0_35, %c0_36] : memref<32x32xf32, #tpu.memory_space<vmem>>, vector<32x32xf32>
      %c0_37 = arith.constant 0 : index
      %c0_38 = arith.constant 0 : index
      %45 = vector.load %arg8[%c0_37, %c0_38] : memref<1x32xf32, #tpu.memory_space<vmem>>, vector<1x32xf32>
      %46 = math.absf %44 : vector<32x32xf32>
      %47 = vector.shape_cast %46 : vector<32x32xf32> to vector<1x32x32xf32>
      %cst_39 = arith.constant dense<0.000000e+00> : vector<1xf32>
      %48 = vector.multi_reduction <add>, %47, %cst_39 [1, 2] : vector<1x32x32xf32> to vector<1xf32>
      %49 = vector.shape_cast %48 : vector<1xf32> to vector<1x1x1xf32>
      %50 = vector.extract %49[0, 0, 0] : f32 from vector<1x1x1xf32>
      %51 = vector.shape_cast %45 : vector<1x32xf32> to vector<1x1x32xf32>
      %cst_40 = arith.constant dense<0.000000e+00> : vector<1xf32>
      %52 = vector.multi_reduction <add>, %51, %cst_40 [1, 2] : vector<1x1x32xf32> to vector<1xf32>
      %53 = vector.shape_cast %52 : vector<1xf32> to vector<1x1x1xf32>
      %54 = vector.extract %53[0, 0, 0] : f32 from vector<1x1x1xf32>
      %55 = arith.subf %50, %54 : f32
      %cst_41 = arith.constant 0.0666666701 : f32
      %56 = arith.mulf %55, %cst_41 : f32
      %cst_42 = arith.constant 0.0666666701 : f32
      %57 = vector.broadcast %cst_42 : f32 to vector<1x32xf32>
      %58 = arith.mulf %45, %57 : vector<1x32xf32>
      %cst_43 = arith.constant 1.000000e-07 : f32
      %59 = vector.broadcast %cst_43 : f32 to vector<1x32xf32>
      %60 = arith.addf %58, %59 : vector<1x32xf32>
      %cst_44 = arith.constant 1.000000e-07 : f32
      %61 = vector.broadcast %cst_44 : f32 to vector<1x32xf32>
      %62 = arith.addf %60, %61 : vector<1x32xf32>
      %cst_45 = arith.constant 1.000000e+00 : f32
      %63 = vector.broadcast %cst_45 : f32 to vector<1x32xf32>
      %64 = arith.divf %63, %62 : vector<1x32xf32>
      %65 = arith.subf %64, %60 : vector<1x32xf32>
      %66 = math.absf %65 : vector<1x32xf32>
      %67 = vector.shape_cast %66 : vector<1x32xf32> to vector<1x1x32xf32>
      %cst_46 = arith.constant dense<0.000000e+00> : vector<1xf32>
      %68 = vector.multi_reduction <add>, %67, %cst_46 [1, 2] : vector<1x1x32xf32> to vector<1xf32>
      %69 = vector.shape_cast %68 : vector<1xf32> to vector<1x1x1xf32>
      %70 = vector.extract %69[0, 0, 0] : f32 from vector<1x1x1xf32>
      %71 = arith.addf %56, %70 : f32
      %c0_47 = arith.constant 0 : index
      %c0_48 = arith.constant 0 : index
      %72 = vector.load %arg7[%c0_47, %c0_48] : memref<32x32xf32, #tpu.memory_space<vmem>>, vector<32x32xf32>
      %c0_49 = arith.constant 0 : index
      %c0_50 = arith.constant 0 : index
      %73 = vector.load %arg9[%c0_49, %c0_50] : memref<1x32xf32, #tpu.memory_space<vmem>>, vector<1x32xf32>
      %74 = math.absf %72 : vector<32x32xf32>
      %75 = vector.shape_cast %74 : vector<32x32xf32> to vector<1x32x32xf32>
      %cst_51 = arith.constant dense<0.000000e+00> : vector<1xf32>
      %76 = vector.multi_reduction <add>, %75, %cst_51 [1, 2] : vector<1x32x32xf32> to vector<1xf32>
      %77 = vector.shape_cast %76 : vector<1xf32> to vector<1x1x1xf32>
      %78 = vector.extract %77[0, 0, 0] : f32 from vector<1x1x1xf32>
      %79 = vector.shape_cast %73 : vector<1x32xf32> to vector<1x1x32xf32>
      %cst_52 = arith.constant dense<0.000000e+00> : vector<1xf32>
      %80 = vector.multi_reduction <add>, %79, %cst_52 [1, 2] : vector<1x1x32xf32> to vector<1xf32>
      %81 = vector.shape_cast %80 : vector<1xf32> to vector<1x1x1xf32>
      %82 = vector.extract %81[0, 0, 0] : f32 from vector<1x1x1xf32>
      %83 = arith.subf %78, %82 : f32
      %cst_53 = arith.constant 0.0666666701 : f32
      %84 = arith.mulf %83, %cst_53 : f32
      %cst_54 = arith.constant 0.0666666701 : f32
      %85 = vector.broadcast %cst_54 : f32 to vector<1x32xf32>
      %86 = arith.mulf %73, %85 : vector<1x32xf32>
      %cst_55 = arith.constant 1.000000e-07 : f32
      %87 = vector.broadcast %cst_55 : f32 to vector<1x32xf32>
      %88 = arith.addf %86, %87 : vector<1x32xf32>
      %cst_56 = arith.constant 1.000000e-07 : f32
      %89 = vector.broadcast %cst_56 : f32 to vector<1x32xf32>
      %90 = arith.addf %88, %89 : vector<1x32xf32>
      %cst_57 = arith.constant 1.000000e+00 : f32
      %91 = vector.broadcast %cst_57 : f32 to vector<1x32xf32>
      %92 = arith.divf %91, %90 : vector<1x32xf32>
      %93 = arith.subf %92, %88 : vector<1x32xf32>
      %94 = math.absf %93 : vector<1x32xf32>
      %95 = vector.shape_cast %94 : vector<1x32xf32> to vector<1x1x32xf32>
      %cst_58 = arith.constant dense<0.000000e+00> : vector<1xf32>
      %96 = vector.multi_reduction <add>, %95, %cst_58 [1, 2] : vector<1x1x32xf32> to vector<1xf32>
      %97 = vector.shape_cast %96 : vector<1xf32> to vector<1x1x1xf32>
      %98 = vector.extract %97[0, 0, 0] : f32 from vector<1x1x1xf32>
      %99 = arith.addf %84, %98 : f32
      %100 = arith.addf %71, %99 : f32
      %cst_59 = arith.constant 0.244140625 : f32
      %101 = arith.mulf %cst_59, %100 : f32
      %c0_60 = arith.constant 0 : index
      %c0_61 = arith.constant 0 : index
      %102 = vector.load %arg10[%c0_60, %c0_61] : memref<1x1xf32, #tpu.memory_space<vmem>>, vector<1x1xf32>
      %cst_62 = arith.constant 3.125000e-02 : f32
      %103 = vector.broadcast %cst_62 : f32 to vector<1x1xf32>
      %104 = arith.mulf %103, %102 : vector<1x1xf32>
      %105 = vector.broadcast %101 : f32 to vector<1x1xf32>
      %106 = arith.addf %104, %105 : vector<1x1xf32>
      %c0_63 = arith.constant 0 : index
      %c0_64 = arith.constant 0 : index
      %107 = vector.load %arg5[%c0_63, %c0_64] : memref<1x1xf32, #tpu.memory_space<vmem>>, vector<1x1xf32>
      tpu.vector_store %arg5[%c0_63, %c0_64], %106 {strides = array<i32>} : memref<1x1xf32, #tpu.memory_space<vmem>>, vector<1x1xf32>,
    } else {
    }
    return
  }
  func.func @transform_0(%arg0: i32) -> (i32, i32) {
    %c0_i32 = arith.constant 0 : i32
    %c0_i32_0 = arith.constant 0 : i32
    %c0_i32_1 = arith.constant 0 : i32
    return %c0_i32, %c0_i32_0 : i32, i32
  }
  func.func @transform_1(%arg0: i32) -> (i32, i32) {
    %c0_i32 = arith.constant 0 : i32
    %c0_i32_0 = arith.constant 0 : i32
    %c0_i32_1 = arith.constant 0 : i32
    return %c0_i32, %c0_i32_0 : i32, i32
  }
  func.func @transform_2(%arg0: i32) -> (i32, i32) {
    %c0_i32 = arith.constant 0 : i32
    %c0_i32_0 = arith.constant 0 : i32
    return %arg0, %c0_i32 : i32, i32
  }
  func.func @transform_3(%arg0: i32) -> (i32, i32) {
    %c0_i32 = arith.constant 0 : i32
    %c0_i32_0 = arith.constant 0 : i32
    return %arg0, %c0_i32 : i32, i32
  }
  func.func @transform_4(%arg0: i32) -> (i32, i32) {
    %c0_i32 = arith.constant 0 : i32
    %c0_i32_0 = arith.constant 0 : i32
    %c0_i32_1 = arith.constant 0 : i32
    return %c0_i32, %c0_i32_0 : i32, i32
  }
}

</mosaic_0001>

<llo_original>
// kernel: tpu_custom_call.1
$region0: #{tpu_custom_call.1}
  #allocation0 [shape = 'u32[]', space=smem, size = 0x4, offset = 0x4, fixed_abs, tag = 'smem constant byte address 0x4 - core index']
  #allocation1 [shape = 'u32[144,128]{1,0:T(1,128)}', space=vmem, size = 0x12000, scoped, tag = 'internal scratch']
  #allocation2 [shape = 'f32[32,32]{1,0:T(8,128)}', space=vmem, size = 0x4000, scoped, tag = 'scratch operand']
  #allocation3 [shape = 'f32[32,32]{1,0:T(8,128)}', space=vmem, size = 0x4000, scoped, tag = 'scratch operand']
  #allocation4 [shape = 'f32[1,32]{1,0:T(1,128)}', space=vmem, size = 0x200, scoped, tag = 'scratch operand']
  #allocation5 [shape = 'f32[1,32]{1,0:T(1,128)}', space=vmem, size = 0x200, scoped, tag = 'scratch operand']
  #allocation6 [shape = 'f32[1,1]{1,0:T(1,128)}', space=vmem, size = 0x200, scoped, tag = 'scratch operand']
  %s0 = inlined_call_operand.hbm [shape: f32[1,32], index: 0, kind: input, shape index: {}]
  %s1 = inlined_call_operand.vmem [shape: f32[1,32], index: 1, kind: input, shape index: {}]
  %s2 = inlined_call_operand.hbm [shape: f32[16,32], index: 2, kind: input, shape index: {}]
  %s3 = inlined_call_operand.hbm [shape: f32[16,32], index: 3, kind: input, shape index: {}]
  %s4 = inlined_call_operand.hbm [shape: f32[1,1], index: 4, kind: output, shape index: {}]
  %s5 = sld [smem:[#allocation0]]
  $region46: #{tpu_custom_call.1} parent=0
    _
  %s7 = ssub.s32 1, %s5
  %s8 = scalar_select 0, %s7, %s5
  $region1: #{tpu_custom_call.1} parent=0
    #allocation7 [shape = 'u8[512]{0}', space=vmem, size = 0x400, scoped, tag = 'input window, operand 0, single buffered']
    #allocation8 [shape = 's32[1]{0}', space=sflag, size = 0x4, scoped, tag = 'scoped memory for tpu_custom_call.1']
    #allocation9 [shape = 's32[1]{0}', space=sflag, size = 0x4, scoped, tag = 'scoped memory for tpu_custom_call.1']
    #allocation10 [shape = 'u8[8192]{0}', space=vmem, size = 0x2000, scoped, tag = 'input window, operand 2, single buffered']
    #allocation11 [shape = 's32[1]{0}', space=sflag, size = 0x4, scoped, tag = 'scoped memory for tpu_custom_call.1']
    #allocation12 [shape = 'u8[8192]{0}', space=vmem, size = 0x2000, scoped, tag = 'input window, operand 3, single buffered']
    #allocation13 [shape = 'u8[512]{0}', space=vmem, size = 0x400, scoped, tag = 'output window, operand 0, single buffered']
    %9 = vsyncpa [#allocation8], 0
    %10 = vsyncpa [#allocation11], 0
    %11 = vsyncpa [#allocation9], 0
    // Predicated region
    $region2: #{tpu_custom_call.1} parent=1 // pred_check
      _
    $region3: #{tpu_custom_call.1} parent=1 // pred_check_branch
      %13 = sbr.rel (0) target = $region5
    $region4: #{tpu_custom_call.1} parent=1 // pred_region
      %s15 = ssub.s32 16, 16
      %16 = vsyncadd [#allocation8], %s15
      %s18 = sshll.u32 [#allocation7], 4
      %s19 = int_to_ptr.vmem [resolvable:$true] %s18
      %21 = dma.hbm_to_vmem [thread:$0]  %s0, 16, %s19, [#allocation8]
    $region5: #{tpu_custom_call.1} parent=1 // pred_fallthru
      _
    // Predicated region
    $region6: #{tpu_custom_call.1} parent=1 // pred_check
      _
    $region7: #{tpu_custom_call.1} parent=1 // pred_check_branch
      %23 = sbr.rel (0) target = $region9
    $region8: #{tpu_custom_call.1} parent=1 // pred_region
      _
    $region9: #{tpu_custom_call.1} parent=1 // pred_fallthru
      _
    // Predicated region
    $region10: #{tpu_custom_call.1} parent=1 // pred_check
      _
    $region11: #{tpu_custom_call.1} parent=1 // pred_check_branch
      %25 = sbr.rel (0) target = $region13
    $region12: #{tpu_custom_call.1} parent=1 // pred_region
      %s27 = ssub.s32 256, 256
      %28 = vsyncadd [#allocation11], %s27
      %s29 = sshll.u32 [#allocation10], 4
      %s30 = int_to_ptr.vmem [resolvable:$true] %s29
      %35 = dma.hbm_to_vmem [thread:$0]  %s2, 256, %s30, [#allocation11], 128, 128, 8
    $region13: #{tpu_custom_call.1} parent=1 // pred_fallthru
      _
    // Predicated region
    $region14: #{tpu_custom_call.1} parent=1 // pred_check
      _
    $region15: #{tpu_custom_call.1} parent=1 // pred_check_branch
      %37 = sbr.rel (0) target = $region17
    $region16: #{tpu_custom_call.1} parent=1 // pred_region
      %s39 = ssub.s32 256, 256
      %40 = vsyncadd [#allocation11], %s39
      %s41 = sshll.u32 [#allocation12], 4
      %s42 = int_to_ptr.vmem [resolvable:$true] %s41
      %47 = dma.hbm_to_vmem [thread:$0]  %s3, 256, %s42, [#allocation11], 128, 128, 8
    $region17: #{tpu_custom_call.1} parent=1 // pred_fallthru
      _
    // Predicated region
    $region18: #{tpu_custom_call.1} parent=1 // pred_check
      _
    $region19: #{tpu_custom_call.1} parent=1 // pred_check_branch
      %49 = sbr.rel (0) target = $region21
    $region20: #{tpu_custom_call.1} parent=1 // pred_region
      %50 = dma.done [#allocation8], 16
    $region21: #{tpu_custom_call.1} parent=1 // pred_fallthru
      _
    // Predicated region
    $region22: #{tpu_custom_call.1} parent=1 // pred_check
      _
    $region23: #{tpu_custom_call.1} parent=1 // pred_check_branch
      %52 = sbr.rel (0) target = $region25
    $region24: #{tpu_custom_call.1} parent=1 // pred_region
      %53 = dma.done [#allocation11], 256
    $region25: #{tpu_custom_call.1} parent=1 // pred_fallthru
      _
    // Predicated region
    $region26: #{tpu_custom_call.1} parent=1 // pred_check
      _
    $region27: #{tpu_custom_call.1} parent=1 // pred_check_branch
      %55 = sbr.rel (0) target = $region29
    $region28: #{tpu_custom_call.1} parent=1 // pred_region
      %56 = dma.done [#allocation11], 256
    $region29: #{tpu_custom_call.1} parent=1 // pred_fallthru
      _
    %p57 = scmp.eq.s32.totalorder 0, 0
    // Predicated region
    $region30: #{tpu_custom_call.1} parent=1 // pred_check
      %p58 = pneg %p57
    $region31: #{tpu_custom_call.1} parent=1 // pred_check_branch
      %60 = sbr.rel (%p58) target = $region33
    $region32: #{tpu_custom_call.1} parent=1 // pred_region
      %vm61 = vcmask 261120
      %62 = vst.msk [vmem:[#allocation2] sm:$0xff] %vm61, 0.0
      %63 = vst.msk [vmem:[#allocation2 + $0x8] sm:$0xff] %vm61, 0.0
      %64 = vst.msk [vmem:[#allocation2 + $0x10] sm:$0xff] %vm61, 0.0
      %65 = vst.msk [vmem:[#allocation2 + $0x18] sm:$0xff] %vm61, 0.0
      %66 = vst.msk [vmem:[#allocation3] sm:$0xff] %vm61, 0.0
      %67 = vst.msk [vmem:[#allocation3 + $0x8] sm:$0xff] %vm61, 0.0
      %68 = vst.msk [vmem:[#allocation3 + $0x10] sm:$0xff] %vm61, 0.0
      %69 = vst.msk [vmem:[#allocation3 + $0x18] sm:$0xff] %vm61, 0.0
      %vm70 = vcmask 253952
      %71 = vst.msk [vmem:[#allocation4] sm:$0x1] %vm70, 0.0
      %72 = vst.msk [vmem:[#allocation5] sm:$0x1] %vm70, 0.0
      %vm73 = vcmask 0
      %74 = vst.msk [vmem:[#allocation6] sm:$0x1] %vm73, 0.0
    $region33: #{tpu_custom_call.1} parent=1 // pred_fallthru
      _
    %v75 = vld [vmem:[#allocation10] sm:$0xff]
    %v76 = vld [vmem:[#allocation10 + $0x8] sm:$0xff]
    %v77 = vld [vmem:[#allocation7] sm:$0x1]
    %v79 = vlaneseq
    %v80 = vshrl.u32 %v79, 7
    %v81 = vsub.s32 0, %v80
    %v82 = vrot.slane %v77, %v81
    %v84 = vsub.f32 %v75, %v82
    %v85 = vsub.f32 %v76, %v82
    %v86 = vld [vmem:[#allocation12] sm:$0xff]
    %v87 = vld [vmem:[#allocation12 + $0x8] sm:$0xff]
    %v88 = vld [vmem:[%s1] sm:$0x1]
    %v90 = vlaneseq
    %v91 = vshrl.u32 %v90, 7
    %v92 = vsub.s32 0, %v91
    %v93 = vrot.slane %v88, %v92
    %v95 = vsub.f32 %v86, %v93
    %v96 = vsub.f32 %v87, %v93
    %v97 = vld [vmem:[#allocation2] sm:$0xff]
    %v98 = vld [vmem:[#allocation2 + $0x8] sm:$0xff]
    %v99 = vld [vmem:[#allocation2 + $0x10] sm:$0xff]
    %v100 = vld [vmem:[#allocation2 + $0x18] sm:$0xff]
    %101 = vxpose.xlu0.b32.start [1/16] %v84, 128
    %102 = vxpose.xlu0.b32.cont [2/16] %v85, 128
    %103 = vxpose.xlu0.b32.cont [3/16] 0.0, 128
    %104 = vxpose.xlu0.b32.cont [4/16] 0.0, 128
    %105 = vxpose.xlu0.b32.cont [5/16] 0.0, 128
    %106 = vxpose.xlu0.b32.cont [6/16] 0.0, 128
    %107 = vxpose.xlu0.b32.cont [7/16] 0.0, 128
    %108 = vxpose.xlu0.b32.cont [8/16] 0.0, 128
    %109 = vxpose.xlu0.b32.cont [9/16] 0.0, 128
    %110 = vxpose.xlu0.b32.cont [10/16] 0.0, 128
    %111 = vxpose.xlu0.b32.cont [11/16] 0.0, 128
    %112 = vxpose.xlu0.b32.cont [12/16] 0.0, 128
    %113 = vxpose.xlu0.b32.cont [13/16] 0.0, 128
    %114 = vxpose.xlu0.b32.cont [14/16] 0.0, 128
    %115 = vxpose.xlu0.b32.cont [15/16] 0.0, 128
    %116 = vxpose.xlu0.b32.end [16/16] 0.0, 128
    %v117 = vpop.trf.xlu0
    %v118 = vpop.trf.xlu0
    %v119 = vpop.trf.xlu0
    %v120 = vpop.trf.xlu0
    %v121 = vpop.trf.xlu0
    %v122 = vpop.trf.xlu0
    %v123 = vpop.trf.xlu0
    %v124 = vpop.trf.xlu0
    %v125 = vpop.trf.xlu0
    %v126 = vpop.trf.xlu0
    %v127 = vpop.trf.xlu0
    %v128 = vpop.trf.xlu0
    %v129 = vpop.trf.xlu0
    %v130 = vpop.trf.xlu0
    %v131 = vpop.trf.xlu0
    %v132 = vpop.trf.xlu0
    %vm133 = vcmask 130048
    %v135 = vsel %vm133, %v117, 0
    %v138 = vsel %vm133, %v118, 0
    %v141 = vsel %vm133, %v119, 0
    %v144 = vsel %vm133, %v120, 0
    %146 = vmatprep.subr.mxu0 0.0
    %147 = vmatpush1.msra.mxu0 %v84
    %148 = vmatprep.subr.mxu0 0.0
    %149 = vmatpush1.msra.mxu0 %v85
    %150 = vmatprep.subr.mxu0 0.0
    %151 = vmatpush1.msra.mxu0 0.0
    %152 = vmatprep.subr.mxu0 0.0
    %153 = vmatpush1.msra.mxu0 0.0
    %154 = vmatprep.subr.mxu0 0.0
    %155 = vmatpush1.msra.mxu0 0.0
    %156 = vmatprep.subr.mxu0 0.0
    %157 = vmatpush1.msra.mxu0 0.0
    %158 = vmatprep.subr.mxu0 0.0
    %159 = vmatpush1.msra.mxu0 0.0
    %160 = vmatprep.subr.mxu0 0.0
    %161 = vmatpush1.msra.mxu0 0.0
    %162 = vmatprep.subr.mxu0 0.0
    %163 = vmatpush1.msra.mxu0 0.0
    %164 = vmatprep.subr.mxu0 0.0
    %165 = vmatpush1.msra.mxu0 0.0
    %166 = vmatprep.subr.mxu0 0.0
    %167 = vmatpush1.msra.mxu0 0.0
    %168 = vmatprep.subr.mxu0 0.0
    %169 = vmatpush1.msra.mxu0 0.0
    %170 = vmatprep.subr.mxu0 0.0
    %171 = vmatpush1.msra.mxu0 0.0
    %172 = vmatprep.subr.mxu0 0.0
    %173 = vmatpush1.msra.mxu0 0.0
    %174 = vmatprep.subr.mxu0 0.0
    %175 = vmatpush1.msra.mxu0 0.0
    %176 = vmatprep.subr.mxu0 0.0
    %177 = vmatpush1.msra.mxu0 0.0
    %178 = vmatprep.subr.mxu0 0.0
    %179 = vmatpush1.msra.mxu0 0.0
    %180 = vmatprep.subr.mxu0 0.0
    %181 = vmatpush1.msra.mxu0 0.0
    %182 = vmatprep.subr.mxu0 0.0
    %183 = vmatpush1.msra.mxu0 0.0
    %184 = vmatprep.subr.mxu0 0.0
    %185 = vmatpush1.msra.mxu0 0.0
    %186 = vmatprep.subr.mxu0 0.0
    %187 = vmatpush1.msra.mxu0 0.0
    %188 = vmatprep.subr.mxu0 0.0
    %189 = vmatpush1.msra.mxu0 0.0
    %190 = vmatprep.subr.mxu0 0.0
    %191 = vmatpush1.msra.mxu0 0.0
    %192 = vmatprep.subr.mxu0 0.0
    %193 = vmatpush1.msra.mxu0 0.0
    %194 = vmatprep.subr.mxu0 0.0
    %195 = vmatpush1.msra.mxu0 0.0
    %196 = vmatprep.subr.mxu0 0.0
    %197 = vmatpush1.msra.mxu0 0.0
    %198 = vmatprep.subr.mxu0 0.0
    %199 = vmatpush1.msra.mxu0 0.0
    %200 = vmatprep.subr.mxu0 0.0
    %201 = vmatpush1.msra.mxu0 0.0
    %202 = vmatprep.subr.mxu0 0.0
    %203 = vmatpush1.msra.mxu0 0.0
    %204 = vmatprep.subr.mxu0 0.0
    %205 = vmatpush1.msra.mxu0 0.0
    %206 = vmatprep.subr.mxu0 0.0
    %207 = vmatpush1.msra.mxu0 0.0
    %208 = vmatprep.subr.mxu0 0.0
    %209 = vmatpush1.msra.mxu0 0.0
    %210 = vmatprep.mubr.f32.mxu0 0.0
    %211 = vmatmul.mubr.f32.gmra.mrb[0].mxu0 %v135
    %v212 = vpop.f32.mrb[0].mxu0
    %v213 = vadd.f32 0.0, %v212
    %v214 = vpop.f32.mrb[0].mxu0
    %215 = vmatprep.mubr.f32.mxu0 0.0
    %216 = vmatmul.mubr.f32.gmra.mrb[0].mxu0 %v138
    %v217 = vpop.f32.mrb[0].mxu0
    %v218 = vadd.f32 0.0, %v217
    %v219 = vpop.f32.mrb[0].mxu0
    %220 = vmatprep.mubr.f32.mxu0 0.0
    %221 = vmatmul.mubr.f32.gmra.mrb[0].mxu0 %v141
    %v222 = vpop.f32.mrb[0].mxu0
    %v223 = vadd.f32 0.0, %v222
    %v224 = vpop.f32.mrb[0].mxu0
    %225 = vmatprep.mubr.f32.mxu0 0.0
    %226 = vmatmul.mubr.f32.gmra.mrb[0].mxu0 %v144
    %v227 = vpop.f32.mrb[0].mxu0
    %v228 = vadd.f32 0.0, %v227
    %v229 = vpop.f32.mrb[0].mxu0
    %230 = vdwg.mxu0
    %v231 = vadd.f32 %v97, %v213
    %v232 = vadd.f32 %v98, %v218
    %v233 = vadd.f32 %v99, %v223
    %v234 = vadd.f32 %v100, %v228
    %vm235 = vcmask 261120
    %236 = vst.msk [vmem:[#allocation2] sm:$0xff] %vm235, %v231
    %237 = vst.msk [vmem:[#allocation2 + $0x8] sm:$0xff] %vm235, %v232
    %238 = vst.msk [vmem:[#allocation2 + $0x10] sm:$0xff] %vm235, %v233
    %239 = vst.msk [vmem:[#allocation2 + $0x18] sm:$0xff] %vm235, %v234
    %v240 = vld [vmem:[#allocation3] sm:$0xff]
    %v241 = vld [vmem:[#allocation3 + $0x8] sm:$0xff]
    %v242 = vld [vmem:[#allocation3 + $0x10] sm:$0xff]
    %v243 = vld [vmem:[#allocation3 + $0x18] sm:$0xff]
    %244 = vxpose.xlu0.b32.start [1/16] %v95, 128
    %245 = vxpose.xlu0.b32.cont [2/16] %v96, 128
    %246 = vxpose.xlu0.b32.cont [3/16] 0.0, 128
    %247 = vxpose.xlu0.b32.cont [4/16] 0.0, 128
    %248 = vxpose.xlu0.b32.cont [5/16] 0.0, 128
    %249 = vxpose.xlu0.b32.cont [6/16] 0.0, 128
    %250 = vxpose.xlu0.b32.cont [7/16] 0.0, 128
    %251 = vxpose.xlu0.b32.cont [8/16] 0.0, 128
    %252 = vxpose.xlu0.b32.cont [9/16] 0.0, 128
    %253 = vxpose.xlu0.b32.cont [10/16] 0.0, 128
    %254 = vxpose.xlu0.b32.cont [11/16] 0.0, 128
    %255 = vxpose.xlu0.b32.cont [12/16] 0.0, 128
    %256 = vxpose.xlu0.b32.cont [13/16] 0.0, 128
    %257 = vxpose.xlu0.b32.cont [14/16] 0.0, 128
    %258 = vxpose.xlu0.b32.cont [15/16] 0.0, 128
    %259 = vxpose.xlu0.b32.end [16/16] 0.0, 128
    %v260 = vpop.trf.xlu0
    %v261 = vpop.trf.xlu0
    %v262 = vpop.trf.xlu0
    %v263 = vpop.trf.xlu0
    %v264 = vpop.trf.xlu0
    %v265 = vpop.trf.xlu0
    %v266 = vpop.trf.xlu0
    %v267 = vpop.trf.xlu0
    %v268 = vpop.trf.xlu0
    %v269 = vpop.trf.xlu0
    %v270 = vpop.trf.xlu0
    %v271 = vpop.trf.xlu0
    %v272 = vpop.trf.xlu0
    %v273 = vpop.trf.xlu0
    %v274 = vpop.trf.xlu0
    %v275 = vpop.trf.xlu0
    %v277 = vsel %vm133, %v260, 0
    %v280 = vsel %vm133, %v261, 0
    %v283 = vsel %vm133, %v262, 0
    %v286 = vsel %vm133, %v263, 0
    %288 = vmatprep.subr.mxu0 0.0
    %289 = vmatpush1.msra.mxu0 %v95
    %290 = vmatprep.subr.mxu0 0.0
    %291 = vmatpush1.msra.mxu0 %v96
    %292 = vmatprep.subr.mxu0 0.0
    %293 = vmatpush1.msra.mxu0 0.0
    %294 = vmatprep.subr.mxu0 0.0
    %295 = vmatpush1.msra.mxu0 0.0
    %296 = vmatprep.subr.mxu0 0.0
    %297 = vmatpush1.msra.mxu0 0.0
    %298 = vmatprep.subr.mxu0 0.0
    %299 = vmatpush1.msra.mxu0 0.0
    %300 = vmatprep.subr.mxu0 0.0
    %301 = vmatpush1.msra.mxu0 0.0
    %302 = vmatprep.subr.mxu0 0.0
    %303 = vmatpush1.msra.mxu0 0.0
    %304 = vmatprep.subr.mxu0 0.0
    %305 = vmatpush1.msra.mxu0 0.0
    %306 = vmatprep.subr.mxu0 0.0
    %307 = vmatpush1.msra.mxu0 0.0
    %308 = vmatprep.subr.mxu0 0.0
    %309 = vmatpush1.msra.mxu0 0.0
    %310 = vmatprep.subr.mxu0 0.0
    %311 = vmatpush1.msra.mxu0 0.0
    %312 = vmatprep.subr.mxu0 0.0
    %313 = vmatpush1.msra.mxu0 0.0
    %314 = vmatprep.subr.mxu0 0.0
    %315 = vmatpush1.msra.mxu0 0.0
    %316 = vmatprep.subr.mxu0 0.0
    %317 = vmatpush1.msra.mxu0 0.0
    %318 = vmatprep.subr.mxu0 0.0
    %319 = vmatpush1.msra.mxu0 0.0
    %320 = vmatprep.subr.mxu0 0.0
    %321 = vmatpush1.msra.mxu0 0.0
    %322 = vmatprep.subr.mxu0 0.0
    %323 = vmatpush1.msra.mxu0 0.0
    %324 = vmatprep.subr.mxu0 0.0
    %325 = vmatpush1.msra.mxu0 0.0
    %326 = vmatprep.subr.mxu0 0.0
    %327 = vmatpush1.msra.mxu0 0.0
    %328 = vmatprep.subr.mxu0 0.0
    %329 = vmatpush1.msra.mxu0 0.0
    %330 = vmatprep.subr.mxu0 0.0
    %331 = vmatpush1.msra.mxu0 0.0
    %332 = vmatprep.subr.mxu0 0.0
    %333 = vmatpush1.msra.mxu0 0.0
    %334 = vmatprep.subr.mxu0 0.0
    %335 = vmatpush1.msra.mxu0 0.0
    %336 = vmatprep.subr.mxu0 0.0
    %337 = vmatpush1.msra.mxu0 0.0
    %338 = vmatprep.subr.mxu0 0.0
    %339 = vmatpush1.msra.mxu0 0.0
    %340 = vmatprep.subr.mxu0 0.0
    %341 = vmatpush1.msra.mxu0 0.0
    %342 = vmatprep.subr.mxu0 0.0
    %343 = vmatpush1.msra.mxu0 0.0
    %344 = vmatprep.subr.mxu0 0.0
    %345 = vmatpush1.msra.mxu0 0.0
    %346 = vmatprep.subr.mxu0 0.0
    %347 = vmatpush1.msra.mxu0 0.0
    %348 = vmatprep.subr.mxu0 0.0
    %349 = vmatpush1.msra.mxu0 0.0
    %350 = vmatprep.subr.mxu0 0.0
    %351 = vmatpush1.msra.mxu0 0.0
    %352 = vmatprep.mubr.f32.mxu0 0.0
    %353 = vmatmul.mubr.f32.gmra.mrb[0].mxu0 %v277
    %v354 = vpop.f32.mrb[0].mxu0
    %v355 = vadd.f32 0.0, %v354
    %v356 = vpop.f32.mrb[0].mxu0
    %357 = vmatprep.mubr.f32.mxu0 0.0
    %358 = vmatmul.mubr.f32.gmra.mrb[0].mxu0 %v280
    %v359 = vpop.f32.mrb[0].mxu0
    %v360 = vadd.f32 0.0, %v359
    %v361 = vpop.f32.mrb[0].mxu0
    %362 = vmatprep.mubr.f32.mxu0 0.0
    %363 = vmatmul.mubr.f32.gmra.mrb[0].mxu0 %v283
    %v364 = vpop.f32.mrb[0].mxu0
    %v365 = vadd.f32 0.0, %v364
    %v366 = vpop.f32.mrb[0].mxu0
    %367 = vmatprep.mubr.f32.mxu0 0.0
    %368 = vmatmul.mubr.f32.gmra.mrb[0].mxu0 %v286
    %v369 = vpop.f32.mrb[0].mxu0
    %v370 = vadd.f32 0.0, %v369
    %v371 = vpop.f32.mrb[0].mxu0
    %372 = vdwg.mxu0
    %v373 = vadd.f32 %v240, %v355
    %v374 = vadd.f32 %v241, %v360
    %v375 = vadd.f32 %v242, %v365
    %v376 = vadd.f32 %v243, %v370
    %377 = vst.msk [vmem:[#allocation3] sm:$0xff] %vm235, %v373
    %378 = vst.msk [vmem:[#allocation3 + $0x8] sm:$0xff] %vm235, %v374
    %379 = vst.msk [vmem:[#allocation3 + $0x10] sm:$0xff] %vm235, %v375
    %380 = vst.msk [vmem:[#allocation3 + $0x18] sm:$0xff] %vm235, %v376
    %v381 = vld [vmem:[#allocation4] sm:$0x1]
    %v382 = vmul.f32 %v84, %v84
    %v383 = vmul.f32 %v85, %v85
    %v384 = vsel %vm235, %v382, 0.0
    %v385 = vsel %vm235, %v383, 0.0
    %v386 = vadd.f32 %v384, %v385
    %v387 = vrot.slane %v386, 4
    %v388 = vadd.f32 %v386, %v387
    %v389 = vrot.slane %v388, 2
    %v390 = vadd.f32 %v388, %v389
    %v391 = vrot.slane %v390, 1
    %v392 = vadd.f32 %v390, %v391
    %v393 = vadd.f32 %v381, %v392
    %vm394 = vcmask 253952
    %395 = vst.msk [vmem:[#allocation4] sm:$0x1] %vm394, %v393
    %v396 = vld [vmem:[#allocation5] sm:$0x1]
    %v397 = vmul.f32 %v95, %v95
    %v398 = vmul.f32 %v96, %v96
    %v399 = vsel %vm235, %v397, 0.0
    %v400 = vsel %vm235, %v398, 0.0
    %v401 = vadd.f32 %v399, %v400
    %v402 = vrot.slane %v401, 4
    %v403 = vadd.f32 %v401, %v402
    %v404 = vrot.slane %v403, 2
    %v405 = vadd.f32 %v403, %v404
    %v406 = vrot.slane %v405, 1
    %v407 = vadd.f32 %v405, %v406
    %v408 = vadd.f32 %v396, %v407
    %409 = vst.msk [vmem:[#allocation5] sm:$0x1] %vm394, %v408
    %v410 = vsub.f32 %v84, %v95
    %v411 = vsub.f32 %v85, %v96
    %v412 = vmul.f32 %v410, %v410
    %v413 = vmul.f32 %v411, %v411
    %v414 = vsel %vm235, %v412, 0.0
    %415 = vadd.xlane.f32.xlu0 %v414
    %v416 = vpop.xlane.xlu0 %415
    %v417 = vsel %vm235, %v413, 0.0
    %418 = vadd.xlane.f32.xlu0 %v417
    %v419 = vpop.xlane.xlu0 %418
    %v420 = vrsqrt.pop %v416
    %v421 = vmul.f32 %v416, %v420
    %vm422 = vcmp.eq.f32.partialorder %v416, inf
    %v423 = vsel %vm422, %v416, %v421
    %vm424 = vcmp.eq.f32.partialorder %v416, 0.0
    %v425 = vand.u32 %v416, 2147483648
    %v426 = vsel %vm424, %v425, %v423
    %v427 = vrsqrt.pop %v419
    %v428 = vmul.f32 %v419, %v427
    %vm429 = vcmp.eq.f32.partialorder %v419, inf
    %v430 = vsel %vm429, %v419, %v428
    %vm431 = vcmp.eq.f32.partialorder %v419, 0.0
    %v432 = vand.u32 %v419, 2147483648
    %v433 = vsel %vm431, %v432, %v430
    %v434 = vld [vmem:[#allocation6] sm:$0x1]
    %v435 = vadd.f32 %v426, %v433
    %v436 = vrot.slane %v435, 4
    %v437 = vadd.f32 %v435, %v436
    %v438 = vrot.slane %v437, 2
    %v439 = vadd.f32 %v437, %v438
    %v440 = vrot.slane %v439, 1
    %v441 = vadd.f32 %v439, %v440
    %v442 = vadd.f32 %v434, %v441
    %vm443 = vcmask 0
    %444 = vst.msk [vmem:[#allocation6] sm:$0x1] %vm443, %v442
    // Predicated region
    $region34: #{tpu_custom_call.1} parent=1 // pred_check
      %p445 = pneg %p57
    $region35: #{tpu_custom_call.1} parent=1 // pred_check_branch
      %447 = sbr.rel (%p445) target = $region37
    $region36: #{tpu_custom_call.1} parent=1 // pred_region
      %v448 = vld [vmem:[#allocation2] sm:$0xff]
      %v449 = vld [vmem:[#allocation2 + $0x8] sm:$0xff]
      %v450 = vld [vmem:[#allocation2 + $0x10] sm:$0xff]
      %v451 = vld [vmem:[#allocation2 + $0x18] sm:$0xff]
      %v452 = vld [vmem:[#allocation4] sm:$0x1]
      %v453 = vand.u32 2147483647, %v448
      %v454 = vand.u32 2147483647, %v449
      %v455 = vand.u32 2147483647, %v450
      %v456 = vand.u32 2147483647, %v451
      %v457 = vsel %vm235, %v453, 0.0
      %v458 = vsel %vm235, %v454, 0.0
      %v459 = vadd.f32 %v457, %v458
      %v460 = vsel %vm235, %v455, 0.0
      %v461 = vadd.f32 %v459, %v460
      %v462 = vsel %vm235, %v456, 0.0
      %v463 = vadd.f32 %v461, %v462
      %464 = vadd.xlane.f32.xlu0 %v463
      %v465 = vpop.xlane.xlu0 %464
      %v466 = vrot.slane %v465, 4
      %v467 = vadd.f32 %v465, %v466
      %v468 = vrot.slane %v467, 2
      %v469 = vadd.f32 %v467, %v468
      %v470 = vrot.slane %v469, 1
      %v471 = vadd.f32 %v469, %v470
      %s472 = vtos %v471
      %v473 = vsel %vm394, %v452, 0.0
      %474 = vadd.xlane.f32.xlu0 %v473
      %v475 = vpop.xlane.xlu0 %474
      %v476 = vrot.slane %v475, 4
      %v477 = vadd.f32 %v475, %v476
      %v478 = vrot.slane %v477, 2
      %v479 = vadd.f32 %v477, %v478
      %v480 = vrot.slane %v479, 1
      %v481 = vadd.f32 %v479, %v480
      %s482 = vtos %v481
      %s483 = ssub.f32 %s472, %s482
      %s484 = smul.f32 %s483, 0.06666667
      %v485 = vmul.f32 %v452, 0.06666667
      %v486 = vadd.f32 %v485, 1e-07
      %v487 = vadd.f32 %v486, 1e-07
      %v488 = vrcp.pop %v487
      %v489 = vmul.f32 1.0, %v488
      %v490 = vsub.f32 %v489, %v486
      %v491 = vand.u32 2147483647, %v490
      %v492 = vsel %vm394, %v491, 0.0
      %493 = vadd.xlane.f32.xlu0 %v492
      %v494 = vpop.xlane.xlu0 %493
      %v495 = vrot.slane %v494, 4
      %v496 = vadd.f32 %v494, %v495
      %v497 = vrot.slane %v496, 2
      %v498 = vadd.f32 %v496, %v497
      %v499 = vrot.slane %v498, 1
      %v500 = vadd.f32 %v498, %v499
      %s501 = vtos %v500
      %s502 = sadd.f32 %s484, %s501
      %v503 = vld [vmem:[#allocation3] sm:$0xff]
      %v504 = vld [vmem:[#allocation3 + $0x8] sm:$0xff]
      %v505 = vld [vmem:[#allocation3 + $0x10] sm:$0xff]
      %v506 = vld [vmem:[#allocation3 + $0x18] sm:$0xff]
      %v507 = vld [vmem:[#allocation5] sm:$0x1]
      %v508 = vand.u32 2147483647, %v503
      %v509 = vand.u32 2147483647, %v504
      %v510 = vand.u32 2147483647, %v505
      %v511 = vand.u32 2147483647, %v506
      %v512 = vsel %vm235, %v508, 0.0
      %v513 = vsel %vm235, %v509, 0.0
      %v514 = vadd.f32 %v512, %v513
      %v515 = vsel %vm235, %v510, 0.0
      %v516 = vadd.f32 %v514, %v515
      %v517 = vsel %vm235, %v511, 0.0
      %v518 = vadd.f32 %v516, %v517
      %519 = vadd.xlane.f32.xlu0 %v518
      %v520 = vpop.xlane.xlu0 %519
      %v521 = vrot.slane %v520, 4
      %v522 = vadd.f32 %v520, %v521
      %v523 = vrot.slane %v522, 2
      %v524 = vadd.f32 %v522, %v523
      %v525 = vrot.slane %v524, 1
      %v526 = vadd.f32 %v524, %v525
      %s527 = vtos %v526
      %v528 = vsel %vm394, %v507, 0.0
      %529 = vadd.xlane.f32.xlu0 %v528
      %v530 = vpop.xlane.xlu0 %529
      %v531 = vrot.slane %v530, 4
      %v532 = vadd.f32 %v530, %v531
      %v533 = vrot.slane %v532, 2
      %v534 = vadd.f32 %v532, %v533
      %v535 = vrot.slane %v534, 1
      %v536 = vadd.f32 %v534, %v535
      %s537 = vtos %v536
      %s538 = ssub.f32 %s527, %s537
      %s539 = smul.f32 %s538, 0.06666667
      %v540 = vmul.f32 %v507, 0.06666667
      %v541 = vadd.f32 %v540, 1e-07
      %v542 = vadd.f32 %v541, 1e-07
      %v543 = vrcp.pop %v542
      %v544 = vmul.f32 1.0, %v543
      %v545 = vsub.f32 %v544, %v541
      %v546 = vand.u32 2147483647, %v545
      %v547 = vsel %vm394, %v546, 0.0
      %548 = vadd.xlane.f32.xlu0 %v547
      %v549 = vpop.xlane.xlu0 %548
      %v550 = vrot.slane %v549, 4
      %v551 = vadd.f32 %v549, %v550
      %v552 = vrot.slane %v551, 2
      %v553 = vadd.f32 %v551, %v552
      %v554 = vrot.slane %v553, 1
      %v555 = vadd.f32 %v553, %v554
      %s556 = vtos %v555
      %s557 = sadd.f32 %s539, %s556
      %s558 = sadd.f32 %s502, %s557
      %s559 = smul.f32 %s558, 0.24414063
      %v560 = vld [vmem:[#allocation6] sm:$0x1]
      %v561 = vmul.f32 %v560, 0.03125
      %v562 = vstv %s559
      %v563 = vadd.f32 %v561, %v562
      %564 = vst.msk [vmem:[#allocation13] sm:$0x1] %vm443, %v563
    $region37: #{tpu_custom_call.1} parent=1 // pred_fallthru
      _
    // Predicated region
    $region38: #{tpu_custom_call.1} parent=1 // pred_check
      _
    $region39: #{tpu_custom_call.1} parent=1 // pred_check_branch
      %566 = sbr.rel (0) target = $region41
    $region40: #{tpu_custom_call.1} parent=1 // pred_region
      %s568 = ssub.s32 16, 16
      %569 = vsyncadd [#allocation9], %s568
      %s571 = sshll.u32 [#allocation13], 4
      %s572 = int_to_ptr.vmem [resolvable:$true] %s571
      %574 = dma.vmem_to_hbm [thread:$0]  %s572, 16, %s4, [#allocation9]
    $region41: #{tpu_custom_call.1} parent=1 // pred_fallthru
      _
    // Predicated region
    $region42: #{tpu_custom_call.1} parent=1 // pred_check
      _
    $region43: #{tpu_custom_call.1} parent=1 // pred_check_branch
      %576 = sbr.rel (0) target = $region45
    $region44: #{tpu_custom_call.1} parent=1 // pred_region
      %577 = dma.done [#allocation9], 16
    $region45: #{tpu_custom_call.1} parent=1 // pred_fallthru
      _
    %578 = vsyncpa [#allocation8], 1
    %579 = vsyncpa [#allocation11], 1
    %580 = vsyncpa [#allocation9], 1

</llo_original>
